<compile_context>
chip_gen: v7x
topology: tpu7x:2x2x1
jax: 0.10.0
libtpu: 0.0.40
codegen_flags: <defaults>
</compile_context>

<pallas_src>
import jax
import jax.numpy as jnp
from jax.experimental import pallas as pl
from jax.experimental.pallas import tpu as pltpu

LANE = 128  # TPU lane width; output is padded to this so stores are lane-dense


def _linear_kernel(x_ref, w_ref, b_ref, o_ref):
    # x_ref: (TM, Din) VMEM tile (streamed over batch)
    # w_ref: (Din, LANE) VMEM, zero-padded past Dout, resident across the grid
    # b_ref: (1, LANE)  VMEM, zero-padded past Dout, resident across the grid
    # o_ref: (TM, LANE) lane-dense output tile
    x = x_ref[...]
    w = w_ref[...]
    din = x.shape[1]  # static (== 4)

    # Tiny contraction (K=4): VPU broadcast-multiply-add, no MXU push/pop.
    acc = jnp.broadcast_to(b_ref[...], o_ref.shape).astype(jnp.float32)
    for k in range(din):  # statically unrolled
        acc = acc + x[:, k:k + 1] * w[k:k + 1, :]

    o_ref[...] = acc.astype(o_ref.dtype)


def mlp_forward(x, w_torch, b, *, tm=128):
    """nn.Linear(4, 4) forward: y = x @ w_torch.T + b.

    x:       (B, Din) float32
    w_torch: (Dout, Din) float32  -- PyTorch nn.Linear.weight layout
    b:       (Dout,)  float32
    """
    B, Din = x.shape
    Dout = w_torch.shape[0]
    dout_pad = LANE  # lane-dense output slab

    # Kernel-layout weight (Din, Dout) zero-padded to (Din, 128); bias likewise.
    w = jnp.zeros((Din, dout_pad), x.dtype).at[:, :Dout].set(w_torch.T)
    b2d = jnp.zeros((1, dout_pad), x.dtype).at[:, :Dout].set(b)

    # Row tile: multiple of 8 (f32 sublane), clamped to the padded batch so a
    # small batch runs as a single grid step with no extra per-step overhead.
    tm = max(8, min(tm, ((B + 7) // 8) * 8))
    b_pad = ((B + tm - 1) // tm) * tm
    xp = x if b_pad == B else jnp.zeros((b_pad, Din), x.dtype).at[:B].set(x)

    out = pl.pallas_call(
        _linear_kernel,
        out_shape=jax.ShapeDtypeStruct((b_pad, dout_pad), x.dtype),
        grid=(b_pad // tm,),
        in_specs=[
            pl.BlockSpec((tm, Din), lambda i: (i, 0)),         # x: streamed
            pl.BlockSpec((Din, dout_pad), lambda i: (0, 0)),   # W: VMEM-resident
            pl.BlockSpec((1, dout_pad), lambda i: (0, 0)),     # b: VMEM-resident
        ],
        out_specs=pl.BlockSpec((tm, dout_pad), lambda i: (i, 0)),
        compiler_params=pltpu.CompilerParams(
            # Batch axis carries no reduction -> parallel; v7x shards across 2 TCs.
            dimension_semantics=("parallel",),
        ),
    )(xp, w, b2d)

    # Un-pad back to the logical (B, Dout) result.
    return out[:B, :Dout]


if __name__ == "__main__":
    key = jax.random.PRNGKey(0)
    kx, kw, kb = jax.random.split(key, 3)

    B, Din, Dout = 256, 4, 4  # small; exercises a 2-step batch-parallel grid

    # Deterministic parameter init (Kaiming-uniform-ish bound like nn.Linear).
    bound = 1.0 / (Din ** 0.5)
    w_torch = jax.random.uniform(kw, (Dout, Din), jnp.float32, -bound, bound)
    b = jax.random.uniform(kb, (Dout,), jnp.float32, -bound, bound)
    x = jax.random.normal(kx, (B, Din), jnp.float32)

    y = mlp_forward(x, w_torch, b)
    y = jax.block_until_ready(y)

    # Reference: PyTorch nn.Linear semantics in plain JAX.
    y_ref = x @ w_torch.T + b
    assert y.shape == y_ref.shape, "shape mismatch vs reference"
    assert jnp.allclose(y, y_ref, atol=1e-5), "mismatch vs reference"

    print("KERNEL_OK")
</pallas_src>

<mosaic_0001>
module attributes {stable_mosaic.version = 11 : i64} {
  func.func @_linear_kernel(%arg0: i32, %arg1: memref<128x4xf32, #tpu.memory_space<vmem>>, %arg2: memref<4x128xf32, #tpu.memory_space<vmem>>, %arg3: memref<1x128xf32, #tpu.memory_space<vmem>>, %arg4: memref<128x128xf32, #tpu.memory_space<vmem>>) attributes {dimension_semantics = [#tpu.dimension_semantics<parallel>], iteration_bounds = array<i64: 2>, scalar_prefetch = 0 : i64, scratch_operands = 0 : i64, tpu.core_type = #tpu.core_type<tc>, window_params = [{transform_indices = @transform_0, window_bounds = array<i64: 128, 4>}, {pipeline_mode = #tpu.pipeline_mode<synchronous>, transform_indices = @transform_1, window_bounds = array<i64: 4, 128>}, {pipeline_mode = #tpu.pipeline_mode<synchronous>, transform_indices = @transform_2, window_bounds = array<i64: 1, 128>}, {transform_indices = @transform_3, window_bounds = array<i64: 128, 128>}]} {
    %c0 = arith.constant 0 : index
    %c0_0 = arith.constant 0 : index
    %0 = vector.load %arg1[%c0, %c0_0] : memref<128x4xf32, #tpu.memory_space<vmem>>, vector<128x4xf32>
    %c0_1 = arith.constant 0 : index
    %c0_2 = arith.constant 0 : index
    %1 = vector.load %arg2[%c0_1, %c0_2] : memref<4x128xf32, #tpu.memory_space<vmem>>, vector<4x128xf32>
    %c0_3 = arith.constant 0 : index
    %c0_4 = arith.constant 0 : index
    %2 = vector.load %arg3[%c0_3, %c0_4] : memref<1x128xf32, #tpu.memory_space<vmem>>, vector<1x128xf32>
    %3 = vector.shape_cast %2 : vector<1x128xf32> to vector<1x128xf32>
    %4 = vector.broadcast %3 : vector<1x128xf32> to vector<128x128xf32>
    %5 = vector.extract_strided_slice %0 {offsets = [0, 0], sizes = [128, 1], strides = [1, 1]} : vector<128x4xf32> to vector<128x1xf32>
    %6 = vector.extract_strided_slice %1 {offsets = [0, 0], sizes = [1, 128], strides = [1, 1]} : vector<4x128xf32> to vector<1x128xf32>
    %7 = vector.broadcast %5 : vector<128x1xf32> to vector<128x128xf32>
    %8 = vector.broadcast %6 : vector<1x128xf32> to vector<128x128xf32>
    %9 = arith.mulf %7, %8 : vector<128x128xf32>
    %10 = arith.addf %4, %9 : vector<128x128xf32>
    %11 = vector.extract_strided_slice %0 {offsets = [0, 1], sizes = [128, 1], strides = [1, 1]} : vector<128x4xf32> to vector<128x1xf32>
    %12 = vector.extract_strided_slice %1 {offsets = [1, 0], sizes = [1, 128], strides = [1, 1]} : vector<4x128xf32> to vector<1x128xf32>
    %13 = vector.broadcast %11 : vector<128x1xf32> to vector<128x128xf32>
    %14 = vector.broadcast %12 : vector<1x128xf32> to vector<128x128xf32>
    %15 = arith.mulf %13, %14 : vector<128x128xf32>
    %16 = arith.addf %10, %15 : vector<128x128xf32>
    %17 = vector.extract_strided_slice %0 {offsets = [0, 2], sizes = [128, 1], strides = [1, 1]} : vector<128x4xf32> to vector<128x1xf32>
    %18 = vector.extract_strided_slice %1 {offsets = [2, 0], sizes = [1, 128], strides = [1, 1]} : vector<4x128xf32> to vector<1x128xf32>
    %19 = vector.broadcast %17 : vector<128x1xf32> to vector<128x128xf32>
    %20 = vector.broadcast %18 : vector<1x128xf32> to vector<128x128xf32>
    %21 = arith.mulf %19, %20 : vector<128x128xf32>
    %22 = arith.addf %16, %21 : vector<128x128xf32>
    %23 = vector.extract_strided_slice %0 {offsets = [0, 3], sizes = [128, 1], strides = [1, 1]} : vector<128x4xf32> to vector<128x1xf32>
    %24 = vector.extract_strided_slice %1 {offsets = [3, 0], sizes = [1, 128], strides = [1, 1]} : vector<4x128xf32> to vector<1x128xf32>
    %25 = vector.broadcast %23 : vector<128x1xf32> to vector<128x128xf32>
    %26 = vector.broadcast %24 : vector<1x128xf32> to vector<128x128xf32>
    %27 = arith.mulf %25, %26 : vector<128x128xf32>
    %28 = arith.addf %22, %27 : vector<128x128xf32>
    %c0_5 = arith.constant 0 : index
    %c0_6 = arith.constant 0 : index
    %29 = vector.load %arg4[%c0_5, %c0_6] : memref<128x128xf32, #tpu.memory_space<vmem>>, vector<128x128xf32>
    tpu.vector_store %arg4[%c0_5, %c0_6], %28 {strides = array<i32>} : memref<128x128xf32, #tpu.memory_space<vmem>>, vector<128x128xf32>,
    return
  }
  func.func @transform_0(%arg0: i32) -> (i32, i32) {
    %c0_i32 = arith.constant 0 : i32
    %c0_i32_0 = arith.constant 0 : i32
    return %arg0, %c0_i32 : i32, i32
  }
  func.func @transform_1(%arg0: i32) -> (i32, i32) {
    %c0_i32 = arith.constant 0 : i32
    %c0_i32_0 = arith.constant 0 : i32
    %c0_i32_1 = arith.constant 0 : i32
    return %c0_i32, %c0_i32_0 : i32, i32
  }
  func.func @transform_2(%arg0: i32) -> (i32, i32) {
    %c0_i32 = arith.constant 0 : i32
    %c0_i32_0 = arith.constant 0 : i32
    %c0_i32_1 = arith.constant 0 : i32
    return %c0_i32, %c0_i32_0 : i32, i32
  }
  func.func @transform_3(%arg0: i32) -> (i32, i32) {
    %c0_i32 = arith.constant 0 : i32
    %c0_i32_0 = arith.constant 0 : i32
    return %arg0, %c0_i32 : i32, i32
  }
}

</mosaic_0001>

<llo_original>
// kernel: tpu_custom_call.1
$region0: #{tpu_custom_call.1}
  #allocation0 [shape = 'u32[]', space=smem, size = 0x4, offset = 0x4, fixed_abs, tag = 'smem constant byte address 0x4 - core index']
  #allocation1 [shape = 'u32[144,128]{1,0:T(1,128)}', space=vmem, size = 0x12000, scoped, tag = 'internal scratch']
  %s0 = inlined_call_operand.vmem [shape: f32[256,4], index: 0, kind: input, shape index: {}]
  %s1 = inlined_call_operand.vmem [shape: f32[4,128], index: 1, kind: input, shape index: {}]
  %s2 = inlined_call_operand.vmem [shape: f32[1,128], index: 2, kind: input, shape index: {}]
  %s3 = inlined_call_operand.hbm [shape: f32[256,128], index: 3, kind: output, shape index: {}]
  %s4 = sld [smem:[#allocation0]]
  $region45: #{tpu_custom_call.1} parent=0
    _
  %s6 = ssub.s32 1, %s4
  %s7 = scalar_select 0, %s6, %s4
  $region1: #{tpu_custom_call.1} parent=0
    #allocation2 [shape = 'u8[131072]{0}', space=vmem, size = 0x20000, scoped, tag = 'output window, operand 0']
    #allocation3 [shape = 's32[2]{0}', space=sflag, size = 0x8, scoped, tag = 'scoped memory for tpu_custom_call.1']
    %8 = vsyncpa [#allocation3], 0
    %s9 = scalar_lea.sflag [#allocation3], 1
    %10 = vsyncpa %s9, 0
    loop: start=0, step=1, limit=4
    $region2: #{tpu_custom_call.1} parent=1 // loop_pre_header
      _
    $region3: #{tpu_custom_call.1} parent=1 // loop_header
      %s12 = sphi 0, %s16
      %p13 = scmp.ge.s32.totalorder %s12, 4
      %s22 = sphi 0, %s24
      %s25 = sphi 0, %s22
      %s26 = sphi 0, %s25
      %s42 = sphi 0, %s26
      %s46 = sphi 0, %s46
      %s48 = sphi 0, %s46
      %s49 = sphi 0, %s48
      %s63 = sphi 0, %s49
      %s67 = sphi 0, %s67
      %s69 = sphi 0, %s67
      %s70 = sphi 0, %s69
      %s84 = sphi 0, %s70
      %s90 = sphi 0, %s92
      %s93 = sphi 0, %s90
      %s94 = sphi 0, %s93
      %s110 = sphi 0, %s94
    $region4: #{tpu_custom_call.1} parent=1 // loop_header_branch
      %15 = sbr.rel (%p13) target = $region8
    $region5: #{tpu_custom_call.1} parent=1 // loop_body
      %s17 = ssub.s32 %s12, 1
      %s18 = ssub.s32 %s12, 2
      %s19 = sadd.s32 %s12, 1
      %s20 = ssub.s32 %s12, %s19
      %p21 = scmp.eq.s32.totalorder %s20, 0
      %s23 = sadd.s32 %s22, 1
      %s24 = scalar_select %p21, %s22, %s23
      %p27 = pneg %p21
      %p28 = scmp.eq.s32.totalorder %s12, 1
      %p29 = por %p27, %p28
      %p30 = scmp.ne.s32.totalorder %s22, %s25
      %p31 = scmp.eq.s32.totalorder %s12, 0
      %p32 = por %p30, %p31
      %p33 = scmp.ne.s32.totalorder %s22, %s25
      %p34 = scmp.eq.s32.totalorder %s17, 1
      %p35 = por %p33, %p34
      %p36 = scmp.ne.s32.totalorder %s25, %s26
      %p37 = scmp.eq.s32.totalorder %s17, 0
      %p38 = por %p36, %p37
      %p39 = scmp.ne.s32.totalorder %s25, %s26
      %p40 = scmp.eq.s32.totalorder %s18, 1
      %p41 = por %p39, %p40
      %p43 = scmp.ne.s32.totalorder %s26, %s42
      %p44 = scmp.eq.s32.totalorder %s18, 0
      %p45 = por %p43, %p44
      %s47 = sadd.s32 %s46, 1
      %p50 = scmp.eq.s32.totalorder %s12, 1
      %p51 = scmp.ne.s32.totalorder %s46, %s48
      %p52 = scmp.eq.s32.totalorder %s12, 0
      %p53 = por %p51, %p52
      %p54 = scmp.ne.s32.totalorder %s46, %s48
      %p55 = scmp.eq.s32.totalorder %s17, 1
      %p56 = por %p54, %p55
      %p57 = scmp.ne.s32.totalorder %s48, %s49
      %p58 = scmp.eq.s32.totalorder %s17, 0
      %p59 = por %p57, %p58
      %p60 = scmp.ne.s32.totalorder %s48, %s49
      %p61 = scmp.eq.s32.totalorder %s18, 1
      %p62 = por %p60, %p61
      %p64 = scmp.ne.s32.totalorder %s49, %s63
      %p65 = scmp.eq.s32.totalorder %s18, 0
      %p66 = por %p64, %p65
      %s68 = sadd.s32 %s67, 1
      %p71 = scmp.eq.s32.totalorder %s12, 1
      %p72 = scmp.ne.s32.totalorder %s67, %s69
      %p73 = scmp.eq.s32.totalorder %s12, 0
      %p74 = por %p72, %p73
      %p75 = scmp.ne.s32.totalorder %s67, %s69
      %p76 = scmp.eq.s32.totalorder %s17, 1
      %p77 = por %p75, %p76
      %p78 = scmp.ne.s32.totalorder %s69, %s70
      %p79 = scmp.eq.s32.totalorder %s17, 0
      %p80 = por %p78, %p79
      %p81 = scmp.ne.s32.totalorder %s69, %s70
      %p82 = scmp.eq.s32.totalorder %s18, 1
      %p83 = por %p81, %p82
      %p85 = scmp.ne.s32.totalorder %s70, %s84
      %p86 = scmp.eq.s32.totalorder %s18, 0
      %p87 = por %p85, %p86
      %s88 = ssub.s32 %s12, %s19
      %p89 = scmp.eq.s32.totalorder %s88, 0
      %s91 = sadd.s32 %s90, 1
      %s92 = scalar_select %p89, %s90, %s91
      %p95 = pneg %p89
      %p96 = scmp.eq.s32.totalorder %s12, 1
      %p97 = por %p95, %p96
      %p98 = scmp.ne.s32.totalorder %s90, %s93
      %p99 = scmp.eq.s32.totalorder %s12, 0
      %p100 = por %p98, %p99
      %p101 = scmp.ne.s32.totalorder %s90, %s93
      %p102 = scmp.eq.s32.totalorder %s17, 1
      %p103 = por %p101, %p102
      %p104 = scmp.ne.s32.totalorder %s93, %s94
      %p105 = scmp.eq.s32.totalorder %s17, 0
      %p106 = por %p104, %p105
      %p107 = scmp.ne.s32.totalorder %s93, %s94
      %p108 = scmp.eq.s32.totalorder %s18, 1
      %p109 = por %p107, %p108
      %p111 = scmp.ne.s32.totalorder %s94, %s110
      %p112 = scmp.eq.s32.totalorder %s18, 0
      %p113 = por %p111, %p112
      %p114 = scmp.le.s32.totalorder 1, %s12
      %p115 = scmp.lt.s32.totalorder %s12, 3
      %p116 = pnand %p114, %p115
      %p117 = pneg %p116
      // Predicated region
      $region9: #{tpu_custom_call.1} parent=5 // pred_check
        _
      $region10: #{tpu_custom_call.1} parent=5 // pred_check_branch
        %119 = sbr.rel (%p116) target = $region12
      $region11: #{tpu_custom_call.1} parent=5 // pred_region
        %s120 = ssub.s32 %s12, 1
        // Predicated region
        $region13: #{tpu_custom_call.1} parent=11 // pred_check
          %p121 = pneg %p59
        $region14: #{tpu_custom_call.1} parent=11 // pred_check_branch
          %123 = sbr.rel (%p121) target = $region16
        $region15: #{tpu_custom_call.1} parent=11 // pred_region
          _
        $region16: #{tpu_custom_call.1} parent=11 // pred_fallthru
          _
        // Predicated region
        $region17: #{tpu_custom_call.1} parent=11 // pred_check
          %p124 = pneg %p80
        $region18: #{tpu_custom_call.1} parent=11 // pred_check_branch
          %126 = sbr.rel (%p124) target = $region20
        $region19: #{tpu_custom_call.1} parent=11 // pred_region
          _
        $region20: #{tpu_custom_call.1} parent=11 // pred_fallthru
          _
      $region12: #{tpu_custom_call.1} parent=5 // pred_fallthru
        _
      %p127 = scmp.lt.s32.totalorder %s12, 2
      // Predicated region
      $region21: #{tpu_custom_call.1} parent=5 // pred_check
        %p128 = pneg %p127
      $region22: #{tpu_custom_call.1} parent=5 // pred_check_branch
        %130 = sbr.rel (%p128) target = $region24
      $region23: #{tpu_custom_call.1} parent=5 // pred_region
        // Predicated region
        $region25: #{tpu_custom_call.1} parent=23 // pred_check
          %p131 = pneg %p32
        $region26: #{tpu_custom_call.1} parent=23 // pred_check_branch
          %133 = sbr.rel (%p131) target = $region28
        $region27: #{tpu_custom_call.1} parent=23 // pred_region
          %s134 = smul.u32 16, %s12
          %p135 = scmp.lt.s32.totalorder %s134, 31
          %s136 = scalar_select %p135, %s134, 31
          %s137 = smul.addr %s136, 8
          %s138 = scalar_lea.vmem %s0, %s137
          %s139 = smul.u32 16, %s12
        $region28: #{tpu_custom_call.1} parent=23 // pred_fallthru
          _
      $region24: #{tpu_custom_call.1} parent=5 // pred_fallthru
        _
      %p140 = scmp.le.s32.totalorder 1, %s12
      %p141 = scmp.lt.s32.totalorder %s12, 3
      %p142 = pnand %p140, %p141
      %p143 = pneg %p142
      // Predicated region
      $region29: #{tpu_custom_call.1} parent=5 // pred_check
        _
      $region30: #{tpu_custom_call.1} parent=5 // pred_check_branch
        %145 = sbr.rel (%p142) target = $region32
      $region31: #{tpu_custom_call.1} parent=5 // pred_region
        %s146 = ssub.s32 %s12, 1
        %s147 = smul.u32 16, %s17
        %p148 = scmp.lt.s32.totalorder %s147, 31
        %s149 = scalar_select %p148, %s147, 31
        %s150 = smul.addr %s149, 8
        %s151 = scalar_lea.vmem %s0, %s150
        %p152 = pneg %p38
        %p153 = pneg %p35
        %p154 = pneg %p59
        %p155 = pneg %p56
        %p156 = pneg %p80
        %p157 = pneg %p77
        %p158 = pneg %p106
        %p159 = pneg %p103
        %s160 = sand.u32 %s93, 1
        %s161 = scalar_lea.sflag [#allocation3], %s160
        %s162 = sand.u32 %s93, 1
        %s163 = smul.addr %s162, 128
        %s164 = scalar_lea.vmem [#allocation2], %s163
        %s165 = smul.u32 16, %s17
        %p166 = scmp.lt.s32.totalorder %s165, 31
        %s167 = scalar_select %p166, %s165, 31
        %s168 = smul.addr %s167, 8
        %s169 = scalar_lea.vmem %s0, %s168
        %s170 = smul.u32 16, %s17
        %s171 = smul.u32 16, %s17
        %v172 = vld [vmem:[%s169] sm:$0xff]
        %v173 = vld [vmem:[%s169 + $0x8] sm:$0xff]
        %v174 = vld [vmem:[%s169 + $0x10] sm:$0xff]
        %v175 = vld [vmem:[%s169 + $0x18] sm:$0xff]
        %v176 = vld [vmem:[%s169 + $0x20] sm:$0xff]
        %v177 = vld [vmem:[%s169 + $0x28] sm:$0xff]
        %v178 = vld [vmem:[%s169 + $0x30] sm:$0xff]
        %v179 = vld [vmem:[%s169 + $0x38] sm:$0xff]
        %v180 = vld [vmem:[%s169 + $0x40] sm:$0xff]
        %v181 = vld [vmem:[%s169 + $0x48] sm:$0xff]
        %v182 = vld [vmem:[%s169 + $0x50] sm:$0xff]
        %v183 = vld [vmem:[%s169 + $0x58] sm:$0xff]
        %v184 = vld [vmem:[%s169 + $0x60] sm:$0xff]
        %v185 = vld [vmem:[%s169 + $0x68] sm:$0xff]
        %v186 = vld [vmem:[%s169 + $0x70] sm:$0xff]
        %v187 = vld [vmem:[%s169 + $0x78] sm:$0xff]
        %v188 = vld [vmem:[%s1] sm:$0xf]
        %v189 = vld [vmem:[%s2] sm:$0x1]
        %v191 = vlaneseq
        %v192 = vshrl.u32 %v191, 7
        %v193 = vsub.s32 0, %v192
        %v194 = vrot.slane %v189, %v193
        %197 = vset.pattern.permute.xlu0 0
        %198 = vperm.xlu0 %197, %v172
        %v199 = vpop.permute.xlu0 %198
        %202 = vset.pattern.permute.xlu0 0
        %203 = vperm.xlu0 %202, %v173
        %v204 = vpop.permute.xlu0 %203
        %207 = vset.pattern.permute.xlu0 0
        %208 = vperm.xlu0 %207, %v174
        %v209 = vpop.permute.xlu0 %208
        %212 = vset.pattern.permute.xlu0 0
        %213 = vperm.xlu0 %212, %v175
        %v214 = vpop.permute.xlu0 %213
        %217 = vset.pattern.permute.xlu0 0
        %218 = vperm.xlu0 %217, %v176
        %v219 = vpop.permute.xlu0 %218
        %222 = vset.pattern.permute.xlu0 0
        %223 = vperm.xlu0 %222, %v177
        %v224 = vpop.permute.xlu0 %223
        %227 = vset.pattern.permute.xlu0 0
        %228 = vperm.xlu0 %227, %v178
        %v229 = vpop.permute.xlu0 %228
        %232 = vset.pattern.permute.xlu0 0
        %233 = vperm.xlu0 %232, %v179
        %v234 = vpop.permute.xlu0 %233
        %237 = vset.pattern.permute.xlu0 0
        %238 = vperm.xlu0 %237, %v180
        %v239 = vpop.permute.xlu0 %238
        %242 = vset.pattern.permute.xlu0 0
        %243 = vperm.xlu0 %242, %v181
        %v244 = vpop.permute.xlu0 %243
        %247 = vset.pattern.permute.xlu0 0
        %248 = vperm.xlu0 %247, %v182
        %v249 = vpop.permute.xlu0 %248
        %252 = vset.pattern.permute.xlu0 0
        %253 = vperm.xlu0 %252, %v183
        %v254 = vpop.permute.xlu0 %253
        %257 = vset.pattern.permute.xlu0 0
        %258 = vperm.xlu0 %257, %v184
        %v259 = vpop.permute.xlu0 %258
        %262 = vset.pattern.permute.xlu0 0
        %263 = vperm.xlu0 %262, %v185
        %v264 = vpop.permute.xlu0 %263
        %267 = vset.pattern.permute.xlu0 0
        %268 = vperm.xlu0 %267, %v186
        %v269 = vpop.permute.xlu0 %268
        %272 = vset.pattern.permute.xlu0 0
        %273 = vperm.xlu0 %272, %v187
        %v274 = vpop.permute.xlu0 %273
        %v276 = vlaneseq
        %v277 = vshrl.u32 %v276, 7
        %v278 = vsub.s32 0, %v277
        %v279 = vrot.slane %v188, %v278
        %v280 = vmul.f32 %v199, %v279
        %v281 = vmul.f32 %v204, %v279
        %v282 = vmul.f32 %v209, %v279
        %v283 = vmul.f32 %v214, %v279
        %v284 = vmul.f32 %v219, %v279
        %v285 = vmul.f32 %v224, %v279
        %v286 = vmul.f32 %v229, %v279
        %v287 = vmul.f32 %v234, %v279
        %v288 = vmul.f32 %v239, %v279
        %v289 = vmul.f32 %v244, %v279
        %v290 = vmul.f32 %v249, %v279
        %v291 = vmul.f32 %v254, %v279
        %v292 = vmul.f32 %v259, %v279
        %v293 = vmul.f32 %v264, %v279
        %v294 = vmul.f32 %v269, %v279
        %v295 = vmul.f32 %v274, %v279
        %v296 = vadd.f32 %v194, %v280
        %v297 = vadd.f32 %v194, %v281
        %v298 = vadd.f32 %v194, %v282
        %v299 = vadd.f32 %v194, %v283
        %v300 = vadd.f32 %v194, %v284
        %v301 = vadd.f32 %v194, %v285
        %v302 = vadd.f32 %v194, %v286
        %v303 = vadd.f32 %v194, %v287
        %v304 = vadd.f32 %v194, %v288
        %v305 = vadd.f32 %v194, %v289
        %v306 = vadd.f32 %v194, %v290
        %v307 = vadd.f32 %v194, %v291
        %v308 = vadd.f32 %v194, %v292
        %v309 = vadd.f32 %v194, %v293
        %v310 = vadd.f32 %v194, %v294
        %v311 = vadd.f32 %v194, %v295
        %312 = vset.pattern.permute.xlu0 1
        %313 = vperm.xlu0 %312, %v172
        %v314 = vpop.permute.xlu0 %313
        %316 = vset.pattern.permute.xlu0 1
        %317 = vperm.xlu0 %316, %v173
        %v318 = vpop.permute.xlu0 %317
        %320 = vset.pattern.permute.xlu0 1
        %321 = vperm.xlu0 %320, %v174
        %v322 = vpop.permute.xlu0 %321
        %324 = vset.pattern.permute.xlu0 1
        %325 = vperm.xlu0 %324, %v175
        %v326 = vpop.permute.xlu0 %325
        %328 = vset.pattern.permute.xlu0 1
        %329 = vperm.xlu0 %328, %v176
        %v330 = vpop.permute.xlu0 %329
        %332 = vset.pattern.permute.xlu0 1
        %333 = vperm.xlu0 %332, %v177
        %v334 = vpop.permute.xlu0 %333
        %336 = vset.pattern.permute.xlu0 1
        %337 = vperm.xlu0 %336, %v178
        %v338 = vpop.permute.xlu0 %337
        %340 = vset.pattern.permute.xlu0 1
        %341 = vperm.xlu0 %340, %v179
        %v342 = vpop.permute.xlu0 %341
        %344 = vset.pattern.permute.xlu0 1
        %345 = vperm.xlu0 %344, %v180
        %v346 = vpop.permute.xlu0 %345
        %348 = vset.pattern.permute.xlu0 1
        %349 = vperm.xlu0 %348, %v181
        %v350 = vpop.permute.xlu0 %349
        %352 = vset.pattern.permute.xlu0 1
        %353 = vperm.xlu0 %352, %v182
        %v354 = vpop.permute.xlu0 %353
        %356 = vset.pattern.permute.xlu0 1
        %357 = vperm.xlu0 %356, %v183
        %v358 = vpop.permute.xlu0 %357
        %360 = vset.pattern.permute.xlu0 1
        %361 = vperm.xlu0 %360, %v184
        %v362 = vpop.permute.xlu0 %361
        %364 = vset.pattern.permute.xlu0 1
        %365 = vperm.xlu0 %364, %v185
        %v366 = vpop.permute.xlu0 %365
        %368 = vset.pattern.permute.xlu0 1
        %369 = vperm.xlu0 %368, %v186
        %v370 = vpop.permute.xlu0 %369
        %372 = vset.pattern.permute.xlu0 1
        %373 = vperm.xlu0 %372, %v187
        %v374 = vpop.permute.xlu0 %373
        %v376 = vlaneseq
        %v377 = vshrl.u32 %v376, 7
        %v378 = vsub.s32 1, %v377
        %v379 = vrot.slane %v188, %v378
        %v380 = vmul.f32 %v314, %v379
        %v381 = vmul.f32 %v318, %v379
        %v382 = vmul.f32 %v322, %v379
        %v383 = vmul.f32 %v326, %v379
        %v384 = vmul.f32 %v330, %v379
        %v385 = vmul.f32 %v334, %v379
        %v386 = vmul.f32 %v338, %v379
        %v387 = vmul.f32 %v342, %v379
        %v388 = vmul.f32 %v346, %v379
        %v389 = vmul.f32 %v350, %v379
        %v390 = vmul.f32 %v354, %v379
        %v391 = vmul.f32 %v358, %v379
        %v392 = vmul.f32 %v362, %v379
        %v393 = vmul.f32 %v366, %v379
        %v394 = vmul.f32 %v370, %v379
        %v395 = vmul.f32 %v374, %v379
        %v396 = vadd.f32 %v296, %v380
        %v397 = vadd.f32 %v297, %v381
        %v398 = vadd.f32 %v298, %v382
        %v399 = vadd.f32 %v299, %v383
        %v400 = vadd.f32 %v300, %v384
        %v401 = vadd.f32 %v301, %v385
        %v402 = vadd.f32 %v302, %v386
        %v403 = vadd.f32 %v303, %v387
        %v404 = vadd.f32 %v304, %v388
        %v405 = vadd.f32 %v305, %v389
        %v406 = vadd.f32 %v306, %v390
        %v407 = vadd.f32 %v307, %v391
        %v408 = vadd.f32 %v308, %v392
        %v409 = vadd.f32 %v309, %v393
        %v410 = vadd.f32 %v310, %v394
        %v411 = vadd.f32 %v311, %v395
        %412 = vset.pattern.permute.xlu0 2
        %413 = vperm.xlu0 %412, %v172
        %v414 = vpop.permute.xlu0 %413
        %416 = vset.pattern.permute.xlu0 2
        %417 = vperm.xlu0 %416, %v173
        %v418 = vpop.permute.xlu0 %417
        %420 = vset.pattern.permute.xlu0 2
        %421 = vperm.xlu0 %420, %v174
        %v422 = vpop.permute.xlu0 %421
        %424 = vset.pattern.permute.xlu0 2
        %425 = vperm.xlu0 %424, %v175
        %v426 = vpop.permute.xlu0 %425
        %428 = vset.pattern.permute.xlu0 2
        %429 = vperm.xlu0 %428, %v176
        %v430 = vpop.permute.xlu0 %429
        %432 = vset.pattern.permute.xlu0 2
        %433 = vperm.xlu0 %432, %v177
        %v434 = vpop.permute.xlu0 %433
        %436 = vset.pattern.permute.xlu0 2
        %437 = vperm.xlu0 %436, %v178
        %v438 = vpop.permute.xlu0 %437
        %440 = vset.pattern.permute.xlu0 2
        %441 = vperm.xlu0 %440, %v179
        %v442 = vpop.permute.xlu0 %441
        %444 = vset.pattern.permute.xlu0 2
        %445 = vperm.xlu0 %444, %v180
        %v446 = vpop.permute.xlu0 %445
        %448 = vset.pattern.permute.xlu0 2
        %449 = vperm.xlu0 %448, %v181
        %v450 = vpop.permute.xlu0 %449
        %452 = vset.pattern.permute.xlu0 2
        %453 = vperm.xlu0 %452, %v182
        %v454 = vpop.permute.xlu0 %453
        %456 = vset.pattern.permute.xlu0 2
        %457 = vperm.xlu0 %456, %v183
        %v458 = vpop.permute.xlu0 %457
        %460 = vset.pattern.permute.xlu0 2
        %461 = vperm.xlu0 %460, %v184
        %v462 = vpop.permute.xlu0 %461
        %464 = vset.pattern.permute.xlu0 2
        %465 = vperm.xlu0 %464, %v185
        %v466 = vpop.permute.xlu0 %465
        %468 = vset.pattern.permute.xlu0 2
        %469 = vperm.xlu0 %468, %v186
        %v470 = vpop.permute.xlu0 %469
        %472 = vset.pattern.permute.xlu0 2
        %473 = vperm.xlu0 %472, %v187
        %v474 = vpop.permute.xlu0 %473
        %v476 = vlaneseq
        %v477 = vshrl.u32 %v476, 7
        %v478 = vsub.s32 2, %v477
        %v479 = vrot.slane %v188, %v478
        %v480 = vmul.f32 %v414, %v479
        %v481 = vmul.f32 %v418, %v479
        %v482 = vmul.f32 %v422, %v479
        %v483 = vmul.f32 %v426, %v479
        %v484 = vmul.f32 %v430, %v479
        %v485 = vmul.f32 %v434, %v479
        %v486 = vmul.f32 %v438, %v479
        %v487 = vmul.f32 %v442, %v479
        %v488 = vmul.f32 %v446, %v479
        %v489 = vmul.f32 %v450, %v479
        %v490 = vmul.f32 %v454, %v479
        %v491 = vmul.f32 %v458, %v479
        %v492 = vmul.f32 %v462, %v479
        %v493 = vmul.f32 %v466, %v479
        %v494 = vmul.f32 %v470, %v479
        %v495 = vmul.f32 %v474, %v479
        %v496 = vadd.f32 %v396, %v480
        %v497 = vadd.f32 %v397, %v481
        %v498 = vadd.f32 %v398, %v482
        %v499 = vadd.f32 %v399, %v483
        %v500 = vadd.f32 %v400, %v484
        %v501 = vadd.f32 %v401, %v485
        %v502 = vadd.f32 %v402, %v486
        %v503 = vadd.f32 %v403, %v487
        %v504 = vadd.f32 %v404, %v488
        %v505 = vadd.f32 %v405, %v489
        %v506 = vadd.f32 %v406, %v490
        %v507 = vadd.f32 %v407, %v491
        %v508 = vadd.f32 %v408, %v492
        %v509 = vadd.f32 %v409, %v493
        %v510 = vadd.f32 %v410, %v494
        %v511 = vadd.f32 %v411, %v495
        %512 = vset.pattern.permute.xlu0 3
        %513 = vperm.xlu0 %512, %v172
        %v514 = vpop.permute.xlu0 %513
        %516 = vset.pattern.permute.xlu0 3
        %517 = vperm.xlu0 %516, %v173
        %v518 = vpop.permute.xlu0 %517
        %520 = vset.pattern.permute.xlu0 3
        %521 = vperm.xlu0 %520, %v174
        %v522 = vpop.permute.xlu0 %521
        %524 = vset.pattern.permute.xlu0 3
        %525 = vperm.xlu0 %524, %v175
        %v526 = vpop.permute.xlu0 %525
        %528 = vset.pattern.permute.xlu0 3
        %529 = vperm.xlu0 %528, %v176
        %v530 = vpop.permute.xlu0 %529
        %532 = vset.pattern.permute.xlu0 3
        %533 = vperm.xlu0 %532, %v177
        %v534 = vpop.permute.xlu0 %533
        %536 = vset.pattern.permute.xlu0 3
        %537 = vperm.xlu0 %536, %v178
        %v538 = vpop.permute.xlu0 %537
        %540 = vset.pattern.permute.xlu0 3
        %541 = vperm.xlu0 %540, %v179
        %v542 = vpop.permute.xlu0 %541
        %544 = vset.pattern.permute.xlu0 3
        %545 = vperm.xlu0 %544, %v180
        %v546 = vpop.permute.xlu0 %545
        %548 = vset.pattern.permute.xlu0 3
        %549 = vperm.xlu0 %548, %v181
        %v550 = vpop.permute.xlu0 %549
        %552 = vset.pattern.permute.xlu0 3
        %553 = vperm.xlu0 %552, %v182
        %v554 = vpop.permute.xlu0 %553
        %556 = vset.pattern.permute.xlu0 3
        %557 = vperm.xlu0 %556, %v183
        %v558 = vpop.permute.xlu0 %557
        %560 = vset.pattern.permute.xlu0 3
        %561 = vperm.xlu0 %560, %v184
        %v562 = vpop.permute.xlu0 %561
        %564 = vset.pattern.permute.xlu0 3
        %565 = vperm.xlu0 %564, %v185
        %v566 = vpop.permute.xlu0 %565
        %568 = vset.pattern.permute.xlu0 3
        %569 = vperm.xlu0 %568, %v186
        %v570 = vpop.permute.xlu0 %569
        %572 = vset.pattern.permute.xlu0 3
        %573 = vperm.xlu0 %572, %v187
        %v574 = vpop.permute.xlu0 %573
        %v576 = vlaneseq
        %v577 = vshrl.u32 %v576, 7
        %v578 = vsub.s32 3, %v577
        %v579 = vrot.slane %v188, %v578
        %v580 = vmul.f32 %v514, %v579
        %v581 = vmul.f32 %v518, %v579
        %v582 = vmul.f32 %v522, %v579
        %v583 = vmul.f32 %v526, %v579
        %v584 = vmul.f32 %v530, %v579
        %v585 = vmul.f32 %v534, %v579
        %v586 = vmul.f32 %v538, %v579
        %v587 = vmul.f32 %v542, %v579
        %v588 = vmul.f32 %v546, %v579
        %v589 = vmul.f32 %v550, %v579
        %v590 = vmul.f32 %v554, %v579
        %v591 = vmul.f32 %v558, %v579
        %v592 = vmul.f32 %v562, %v579
        %v593 = vmul.f32 %v566, %v579
        %v594 = vmul.f32 %v570, %v579
        %v595 = vmul.f32 %v574, %v579
        %v596 = vadd.f32 %v496, %v580
        %v597 = vadd.f32 %v497, %v581
        %v598 = vadd.f32 %v498, %v582
        %v599 = vadd.f32 %v499, %v583
        %v600 = vadd.f32 %v500, %v584
        %v601 = vadd.f32 %v501, %v585
        %v602 = vadd.f32 %v502, %v586
        %v603 = vadd.f32 %v503, %v587
        %v604 = vadd.f32 %v504, %v588
        %v605 = vadd.f32 %v505, %v589
        %v606 = vadd.f32 %v506, %v590
        %v607 = vadd.f32 %v507, %v591
        %v608 = vadd.f32 %v508, %v592
        %v609 = vadd.f32 %v509, %v593
        %v610 = vadd.f32 %v510, %v594
        %v611 = vadd.f32 %v511, %v595
        %612 = vst [vmem:[%s164] sm:$0xff] %v596
        %613 = vst [vmem:[%s164 + $0x8] sm:$0xff] %v597
        %614 = vst [vmem:[%s164 + $0x10] sm:$0xff] %v598
        %615 = vst [vmem:[%s164 + $0x18] sm:$0xff] %v599
        %616 = vst [vmem:[%s164 + $0x20] sm:$0xff] %v600
        %617 = vst [vmem:[%s164 + $0x28] sm:$0xff] %v601
        %618 = vst [vmem:[%s164 + $0x30] sm:$0xff] %v602
        %619 = vst [vmem:[%s164 + $0x38] sm:$0xff] %v603
        %620 = vst [vmem:[%s164 + $0x40] sm:$0xff] %v604
        %621 = vst [vmem:[%s164 + $0x48] sm:$0xff] %v605
        %622 = vst [vmem:[%s164 + $0x50] sm:$0xff] %v606
        %623 = vst [vmem:[%s164 + $0x58] sm:$0xff] %v607
        %624 = vst [vmem:[%s164 + $0x60] sm:$0xff] %v608
        %625 = vst [vmem:[%s164 + $0x68] sm:$0xff] %v609
        %626 = vst [vmem:[%s164 + $0x70] sm:$0xff] %v610
        %627 = vst [vmem:[%s164 + $0x78] sm:$0xff] %v611
        %s628 = sand.u32 %s93, 1
        %s629 = scalar_lea.sflag [#allocation3], %s628
        %s630 = sand.u32 %s93, 1
        %s631 = smul.addr %s630, 128
        %s632 = scalar_lea.vmem [#allocation2], %s631
        // Predicated region
        $region33: #{tpu_custom_call.1} parent=31 // pred_check
          %p633 = pneg %p103
        $region34: #{tpu_custom_call.1} parent=31 // pred_check_branch
          %635 = sbr.rel (%p633) target = $region36
        $region35: #{tpu_custom_call.1} parent=31 // pred_region
          %s636 = smul.u32 16, %s17
          %s638 = ssub.s32 2048, 2048
          %639 = vsyncadd %s629, %s638
          %s640 = smul.addr %s636, 128
          %s641 = scalar_lea.hbm %s3, %s640
          %s642 = sshll.u32 %s632, 4
          %s643 = int_to_ptr.vmem [resolvable:$true] %s642
          %648 = dma.vmem_to_hbm [thread:$0]  %s643, 2048, %s641, %s629, 128, 128, 8
        $region36: #{tpu_custom_call.1} parent=31 // pred_fallthru
          _
      $region32: #{tpu_custom_call.1} parent=5 // pred_fallthru
        _
      %p649 = scmp.le.s32.totalorder 2, %s12
      // Predicated region
      $region37: #{tpu_custom_call.1} parent=5 // pred_check
        %p650 = pneg %p649
      $region38: #{tpu_custom_call.1} parent=5 // pred_check_branch
        %652 = sbr.rel (%p650) target = $region40
      $region39: #{tpu_custom_call.1} parent=5 // pred_region
        %s653 = ssub.s32 %s12, 2
        // Predicated region
        $region41: #{tpu_custom_call.1} parent=39 // pred_check
          %p654 = pneg %p109
        $region42: #{tpu_custom_call.1} parent=39 // pred_check_branch
          %656 = sbr.rel (%p654) target = $region44
        $region43: #{tpu_custom_call.1} parent=39 // pred_region
          %s657 = sand.u32 %s94, 1
          %s658 = scalar_lea.sflag [#allocation3], %s657
          %s659 = sand.u32 %s94, 1
          %s660 = smul.addr %s659, 128
          %s661 = scalar_lea.vmem [#allocation2], %s660
          %662 = dma.done %s658, 2048
        $region44: #{tpu_custom_call.1} parent=39 // pred_fallthru
          _
      $region40: #{tpu_custom_call.1} parent=5 // pred_fallthru
        _
    $region6: #{tpu_custom_call.1} parent=1 // loop_footer
      %s16 = sadd.s32 1, %s12
    $region7: #{tpu_custom_call.1} parent=1 // loop_footer_branch
      %11 = sbr.rel target = $region3
    $region8: #{tpu_custom_call.1} parent=1 // loop_exit
      _
    %663 = vsyncpa [#allocation3], 1
    %s664 = scalar_lea.sflag [#allocation3], 1
    %665 = vsyncpa %s664, 1

</llo_original>
